<compile_context>
chip_gen: v5e
topology: v5e:2x2
jax: 0.10.0
libtpu: 0.0.40
codegen_flags: <defaults>
</compile_context>

<pallas_src>
import jax
import jax.numpy as jnp
from jax.experimental import pallas as pl
from jax.experimental.pallas import tpu as pltpu


def mlp_kernel(x_ref, w1_ref, b1_ref, w2_ref, b2_ref, w3_ref, b3_ref, o_ref):
    # Layer 1: Linear(+pad K) + ReLU  (bf16 MXU, f32 accumulate, f32 VPU epilogue)
    h1 = jnp.dot(x_ref[...], w1_ref[...], preferred_element_type=jnp.float32)
    h1 = jnp.maximum(h1 + b1_ref[...], 0.0)
    # Layer 2: Linear(256, 128) + ReLU
    h2 = jnp.dot(h1.astype(jnp.bfloat16), w2_ref[...],
                 preferred_element_type=jnp.float32)
    h2 = jnp.maximum(h2 + b2_ref[...], 0.0)
    # Layer 3: Linear(128, num_classes padded to 128), no activation
    out = jnp.dot(h2.astype(jnp.bfloat16), w3_ref[...],
                  preferred_element_type=jnp.float32)
    o_ref[...] = (out + b3_ref[...]).astype(o_ref.dtype)


def _round_up(n, m):
    return ((n + m - 1) // m) * m


def mlp_forward(x, w1, b1, w2, b2, w3, b3, *, block_m=256):
    """Fused 3-layer MLP forward.

    x:  (batch, in_features) f32
    w*: (in_features, out_features) f32 (transposed vs. PyTorch storage)
    b*: (1, out_features) f32
    Returns (batch, num_classes) f32.
    """
    batch, in_features = x.shape
    h1_dim = w1.shape[1]
    h2_dim = w2.shape[1]
    num_classes = w3.shape[1]

    # Lane-dense padding of the layer-1 contraction and the output width.
    k1 = _round_up(in_features, 128)
    n3 = _round_up(num_classes, 128)

    # Batch tile: multiple of 16 (bf16 sublane packing); padded batch divides it.
    tm = min(block_m, _round_up(batch, 16))
    bp = _round_up(batch, tm)

    # bf16 operands for the MXU (f32 accumulation inside the kernel).
    xp = jnp.zeros((bp, k1), jnp.bfloat16).at[:batch, :in_features].set(
        x.astype(jnp.bfloat16))
    w1p = jnp.zeros((k1, h1_dim), jnp.bfloat16).at[:in_features, :].set(
        w1.astype(jnp.bfloat16))
    w2p = w2.astype(jnp.bfloat16)
    w3p = jnp.zeros((h2_dim, n3), jnp.bfloat16).at[:, :num_classes].set(
        w3.astype(jnp.bfloat16))
    b1p = b1.astype(jnp.float32)
    b2p = b2.astype(jnp.float32)
    b3p = jnp.zeros((1, n3), jnp.float32).at[:, :num_classes].set(
        b3.astype(jnp.float32))

    grid = (bp // tm,)
    const = lambda shape: pl.BlockSpec(shape, lambda i: (0,) * len(shape))

    flops = 2 * bp * (k1 * h1_dim + h1_dim * h2_dim + h2_dim * n3)
    bytes_accessed = (
        xp.size * 2 + w1p.size * 2 + w2p.size * 2 + w3p.size * 2
        + b1p.size * 4 + b2p.size * 4 + b3p.size * 4 + bp * n3 * 4)

    out = pl.pallas_call(
        mlp_kernel,
        out_shape=jax.ShapeDtypeStruct((bp, n3), jnp.float32),
        grid=grid,
        in_specs=[
            pl.BlockSpec((tm, k1), lambda i: (i, 0)),   # x tile (pipelined)
            const(w1p.shape), const(b1p.shape),         # weights stay resident
            const(w2p.shape), const(b2p.shape),
            const(w3p.shape), const(b3p.shape),
        ],
        out_specs=pl.BlockSpec((tm, n3), lambda i: (i, 0)),
        compiler_params=pltpu.CompilerParams(
            dimension_semantics=("parallel",),
            vmem_limit_bytes=64 << 20,
        ),
        cost_estimate=pl.CostEstimate(
            flops=flops, transcendentals=0, bytes_accessed=bytes_accessed),
    )(xp, w1p, b1p, w2p, b2p, w3p, b3p)

    return out[:batch, :num_classes]


def init_linear(key, in_features, out_features):
    """Deterministic init matching PyTorch nn.Linear default:
    U(-1/sqrt(fan_in), 1/sqrt(fan_in)) for weight and bias.
    Weight returned transposed: (in_features, out_features)."""
    kw, kb = jax.random.split(key)
    bound = 1.0 / jnp.sqrt(jnp.float32(in_features))
    w = jax.random.uniform(kw, (in_features, out_features), jnp.float32, -bound, bound)
    b = jax.random.uniform(kb, (1, out_features), jnp.float32, -bound, bound)
    return w, b


def ref_forward_bf16(x, w1, b1, w2, b2, w3, b3):
    """Plain-JAX reference with the same bf16-operand / f32-accumulate recipe."""
    h1 = jnp.dot(x.astype(jnp.bfloat16), w1.astype(jnp.bfloat16),
                 preferred_element_type=jnp.float32) + b1
    h1 = jnp.maximum(h1, 0.0)
    h2 = jnp.dot(h1.astype(jnp.bfloat16), w2.astype(jnp.bfloat16),
                 preferred_element_type=jnp.float32) + b2
    h2 = jnp.maximum(h2, 0.0)
    return jnp.dot(h2.astype(jnp.bfloat16), w3.astype(jnp.bfloat16),
                   preferred_element_type=jnp.float32) + b3


if __name__ == "__main__":
    batch = 512          # two 256-row batch tiles -> exercises the pipelined grid
    input_size = 32
    num_classes = 10

    key = jax.random.PRNGKey(0)
    kx, k1, k2, k3 = jax.random.split(key, 4)

    x = jax.random.normal(kx, (batch, input_size), jnp.float32)
    w1, b1 = init_linear(k1, input_size, 256)
    w2, b2 = init_linear(k2, 256, 128)
    w3, b3 = init_linear(k3, 128, num_classes)

    out = mlp_forward(x, w1, b1, w2, b2, w3, b3)
    out = jax.block_until_ready(out)

    ref = ref_forward_bf16(x, w1, b1, w2, b2, w3, b3)
    ref = jax.block_until_ready(ref)

    assert out.shape == (batch, num_classes)
    assert jnp.allclose(out, ref, atol=2e-2, rtol=2e-2), (
        float(jnp.max(jnp.abs(out - ref))))

    print("KERNEL_OK")
</pallas_src>

<mosaic_0001>
module attributes {stable_mosaic.version = 11 : i64} {
  func.func @mlp_kernel(%arg0: i32, %arg1: memref<256x128xbf16, #tpu.memory_space<vmem>>, %arg2: memref<128x256xbf16, #tpu.memory_space<vmem>>, %arg3: memref<1x256xf32, #tpu.memory_space<vmem>>, %arg4: memref<256x128xbf16, #tpu.memory_space<vmem>>, %arg5: memref<1x128xf32, #tpu.memory_space<vmem>>, %arg6: memref<128x128xbf16, #tpu.memory_space<vmem>>, %arg7: memref<1x128xf32, #tpu.memory_space<vmem>>, %arg8: memref<256x128xf32, #tpu.memory_space<vmem>>) attributes {dimension_semantics = [#tpu.dimension_semantics<parallel>], iteration_bounds = array<i64: 2>, scalar_prefetch = 0 : i64, scratch_operands = 0 : i64, tpu.core_type = #tpu.core_type<tc>, window_params = [{transform_indices = @transform_0, window_bounds = array<i64: 256, 128>}, {pipeline_mode = #tpu.pipeline_mode<synchronous>, transform_indices = @transform_1, window_bounds = array<i64: 128, 256>}, {pipeline_mode = #tpu.pipeline_mode<synchronous>, transform_indices = @transform_2, window_bounds = array<i64: 1, 256>}, {pipeline_mode = #tpu.pipeline_mode<synchronous>, transform_indices = @transform_3, window_bounds = array<i64: 256, 128>}, {pipeline_mode = #tpu.pipeline_mode<synchronous>, transform_indices = @transform_4, window_bounds = array<i64: 1, 128>}, {pipeline_mode = #tpu.pipeline_mode<synchronous>, transform_indices = @transform_5, window_bounds = array<i64: 128, 128>}, {pipeline_mode = #tpu.pipeline_mode<synchronous>, transform_indices = @transform_6, window_bounds = array<i64: 1, 128>}, {transform_indices = @transform_7, window_bounds = array<i64: 256, 128>}]} {
    %c0 = arith.constant 0 : index
    %c0_0 = arith.constant 0 : index
    %0 = vector.load %arg1[%c0, %c0_0] : memref<256x128xbf16, #tpu.memory_space<vmem>>, vector<256x128xbf16>
    %c0_1 = arith.constant 0 : index
    %c0_2 = arith.constant 0 : index
    %1 = vector.load %arg2[%c0_1, %c0_2] : memref<128x256xbf16, #tpu.memory_space<vmem>>, vector<128x256xbf16>
    %cst = arith.constant dense<0.000000e+00> : vector<256x256xf32>
    %2 = tpu.matmul %0, %1, %cst {dimension_numbers = #tpu.dot_dimension_numbers<[1], [0], [0], [1], [0, 0, 1, 1], [], []>} : vector<256x128xbf16>, vector<128x256xbf16>, vector<256x256xf32> -> vector<256x256xf32>
    %c0_3 = arith.constant 0 : index
    %c0_4 = arith.constant 0 : index
    %3 = vector.load %arg3[%c0_3, %c0_4] : memref<1x256xf32, #tpu.memory_space<vmem>>, vector<1x256xf32>
    %4 = vector.broadcast %3 : vector<1x256xf32> to vector<256x256xf32>
    %5 = arith.addf %2, %4 : vector<256x256xf32>
    %cst_5 = arith.constant 0.000000e+00 : f32
    %6 = vector.broadcast %cst_5 : f32 to vector<256x256xf32>
    %7 = arith.maximumf %5, %6 : vector<256x256xf32>
    %8 = arith.truncf %7 : vector<256x256xf32> to vector<256x256xbf16>
    %c0_6 = arith.constant 0 : index
    %c0_7 = arith.constant 0 : index
    %9 = vector.load %arg4[%c0_6, %c0_7] : memref<256x128xbf16, #tpu.memory_space<vmem>>, vector<256x128xbf16>
    %cst_8 = arith.constant dense<0.000000e+00> : vector<256x128xf32>
    %10 = tpu.matmul %8, %9, %cst_8 {dimension_numbers = #tpu.dot_dimension_numbers<[1], [0], [0], [1], [0, 0, 1, 1], [], []>} : vector<256x256xbf16>, vector<256x128xbf16>, vector<256x128xf32> -> vector<256x128xf32>
    %c0_9 = arith.constant 0 : index
    %c0_10 = arith.constant 0 : index
    %11 = vector.load %arg5[%c0_9, %c0_10] : memref<1x128xf32, #tpu.memory_space<vmem>>, vector<1x128xf32>
    %12 = vector.broadcast %11 : vector<1x128xf32> to vector<256x128xf32>
    %13 = arith.addf %10, %12 : vector<256x128xf32>
    %cst_11 = arith.constant 0.000000e+00 : f32
    %14 = vector.broadcast %cst_11 : f32 to vector<256x128xf32>
    %15 = arith.maximumf %13, %14 : vector<256x128xf32>
    %16 = arith.truncf %15 : vector<256x128xf32> to vector<256x128xbf16>
    %c0_12 = arith.constant 0 : index
    %c0_13 = arith.constant 0 : index
    %17 = vector.load %arg6[%c0_12, %c0_13] : memref<128x128xbf16, #tpu.memory_space<vmem>>, vector<128x128xbf16>
    %cst_14 = arith.constant dense<0.000000e+00> : vector<256x128xf32>
    %18 = tpu.matmul %16, %17, %cst_14 {dimension_numbers = #tpu.dot_dimension_numbers<[1], [0], [0], [1], [0, 0, 1, 1], [], []>} : vector<256x128xbf16>, vector<128x128xbf16>, vector<256x128xf32> -> vector<256x128xf32>
    %c0_15 = arith.constant 0 : index
    %c0_16 = arith.constant 0 : index
    %19 = vector.load %arg7[%c0_15, %c0_16] : memref<1x128xf32, #tpu.memory_space<vmem>>, vector<1x128xf32>
    %20 = vector.broadcast %19 : vector<1x128xf32> to vector<256x128xf32>
    %21 = arith.addf %18, %20 : vector<256x128xf32>
    %c0_17 = arith.constant 0 : index
    %c0_18 = arith.constant 0 : index
    %22 = vector.load %arg8[%c0_17, %c0_18] : memref<256x128xf32, #tpu.memory_space<vmem>>, vector<256x128xf32>
    tpu.vector_store %arg8[%c0_17, %c0_18], %21 {strides = array<i32>} : memref<256x128xf32, #tpu.memory_space<vmem>>, vector<256x128xf32>,
    return
  }
  func.func @transform_0(%arg0: i32) -> (i32, i32) {
    %c0_i32 = arith.constant 0 : i32
    %c0_i32_0 = arith.constant 0 : i32
    return %arg0, %c0_i32 : i32, i32
  }
  func.func @transform_1(%arg0: i32) -> (i32, i32) {
    %c0_i32 = arith.constant 0 : i32
    %c0_i32_0 = arith.constant 0 : i32
    %c0_i32_1 = arith.constant 0 : i32
    return %c0_i32, %c0_i32_0 : i32, i32
  }
  func.func @transform_2(%arg0: i32) -> (i32, i32) {
    %c0_i32 = arith.constant 0 : i32
    %c0_i32_0 = arith.constant 0 : i32
    %c0_i32_1 = arith.constant 0 : i32
    return %c0_i32, %c0_i32_0 : i32, i32
  }
  func.func @transform_3(%arg0: i32) -> (i32, i32) {
    %c0_i32 = arith.constant 0 : i32
    %c0_i32_0 = arith.constant 0 : i32
    %c0_i32_1 = arith.constant 0 : i32
    return %c0_i32, %c0_i32_0 : i32, i32
  }
  func.func @transform_4(%arg0: i32) -> (i32, i32) {
    %c0_i32 = arith.constant 0 : i32
    %c0_i32_0 = arith.constant 0 : i32
    %c0_i32_1 = arith.constant 0 : i32
    return %c0_i32, %c0_i32_0 : i32, i32
  }
  func.func @transform_5(%arg0: i32) -> (i32, i32) {
    %c0_i32 = arith.constant 0 : i32
    %c0_i32_0 = arith.constant 0 : i32
    %c0_i32_1 = arith.constant 0 : i32
    return %c0_i32, %c0_i32_0 : i32, i32
  }
  func.func @transform_6(%arg0: i32) -> (i32, i32) {
    %c0_i32 = arith.constant 0 : i32
    %c0_i32_0 = arith.constant 0 : i32
    %c0_i32_1 = arith.constant 0 : i32
    return %c0_i32, %c0_i32_0 : i32, i32
  }
  func.func @transform_7(%arg0: i32) -> (i32, i32) {
    %c0_i32 = arith.constant 0 : i32
    %c0_i32_0 = arith.constant 0 : i32
    return %arg0, %c0_i32 : i32, i32
  }
}

</mosaic_0001>

<llo_original>
// kernel: tpu_custom_call.1
$region0: #{tpu_custom_call.1}
  #allocation0 [shape = 'u32[]', space=smem, size = 0x4, offset = 0x4, fixed_abs, tag = 'smem constant byte address 0x4 - core index']
  #allocation1 [shape = 'u32[72,128]{1,0:T(1,128)}', space=vmem, size = 0x9000, scoped, tag = 'internal scratch']
  %s0 = inlined_call_operand.hbm [shape: bf16[512,128], index: 0, kind: input, shape index: {}]
  %s1 = inlined_call_operand.hbm [shape: bf16[128,256], index: 1, kind: input, shape index: {}]
  %s2 = inlined_call_operand.hbm [shape: f32[1,256], index: 2, kind: input, shape index: {}]
  %s3 = inlined_call_operand.hbm [shape: bf16[256,128], index: 3, kind: input, shape index: {}]
  %s4 = inlined_call_operand.vmem [shape: f32[1,128], index: 4, kind: input, shape index: {}]
  %s5 = inlined_call_operand.hbm [shape: bf16[128,128], index: 5, kind: input, shape index: {}]
  %s6 = inlined_call_operand.vmem [shape: f32[1,128], index: 6, kind: input, shape index: {}]
  %s7 = inlined_call_operand.hbm [shape: f32[512,128], index: 7, kind: output, shape index: {}]
  %s8 = sld [smem:[#allocation0]]
  $region81: #{tpu_custom_call.1} parent=0
    _
  %s10 = ssub.s32 1, %s8
  %s11 = scalar_select 0, %s10, %s8
  $region1: #{tpu_custom_call.1} parent=0
    #allocation2 [shape = 'u8[131072]{0}', space=vmem, size = 0x20000, scoped, tag = 'input window, operand 0']
    #allocation3 [shape = 's32[2]{0}', space=sflag, size = 0x8, scoped, tag = 'scoped memory for tpu_custom_call.1']
    #allocation4 [shape = 's32[2]{0}', space=sflag, size = 0x8, scoped, tag = 'scoped memory for tpu_custom_call.1']
    #allocation5 [shape = 'u8[65536]{0}', space=vmem, size = 0x10000, scoped, tag = 'input window, operand 1, single buffered']
    #allocation6 [shape = 's32[1]{0}', space=sflag, size = 0x4, scoped, tag = 'scoped memory for tpu_custom_call.1']
    #allocation7 [shape = 'u8[1024]{0}', space=vmem, size = 0x400, scoped, tag = 'input window, operand 2, single buffered']
    #allocation8 [shape = 'u8[65536]{0}', space=vmem, size = 0x10000, scoped, tag = 'input window, operand 3, single buffered']
    #allocation9 [shape = 's32[1]{0}', space=sflag, size = 0x4, scoped, tag = 'scoped memory for tpu_custom_call.1']
    #allocation10 [shape = 'u8[32768]{0}', space=vmem, size = 0x8000, scoped, tag = 'input window, operand 5, single buffered']
    #allocation11 [shape = 'u8[262144]{0}', space=vmem, size = 0x40000, scoped, tag = 'output window, operand 0']
    %12 = vsyncpa [#allocation3], 0
    %s13 = scalar_lea.sflag [#allocation3], 1
    %14 = vsyncpa %s13, 0
    %15 = vsyncpa [#allocation6], 0
    %16 = vsyncpa [#allocation9], 0
    %17 = vsyncpa [#allocation4], 0
    %s18 = scalar_lea.sflag [#allocation4], 1
    %19 = vsyncpa %s18, 0
    loop: start=0, step=1, limit=4
    $region2: #{tpu_custom_call.1} parent=1 // loop_pre_header
      _
    $region3: #{tpu_custom_call.1} parent=1 // loop_header
      %s21 = sphi 0, %s25
      %p22 = scmp.ge.s32.totalorder %s21, 4
      %s31 = sphi 0, %s33
      %s34 = sphi 0, %s31
      %s35 = sphi 0, %s34
      %s51 = sphi 0, %s35
      %s55 = sphi 0, %s55
      %s57 = sphi 0, %s55
      %s58 = sphi 0, %s57
      %s72 = sphi 0, %s58
      %s76 = sphi 0, %s76
      %s78 = sphi 0, %s76
      %s79 = sphi 0, %s78
      %s93 = sphi 0, %s79
      %s97 = sphi 0, %s97
      %s99 = sphi 0, %s97
      %s100 = sphi 0, %s99
      %s114 = sphi 0, %s100
      %s118 = sphi 0, %s118
      %s120 = sphi 0, %s118
      %s121 = sphi 0, %s120
      %s135 = sphi 0, %s121
      %s139 = sphi 0, %s139
      %s141 = sphi 0, %s139
      %s142 = sphi 0, %s141
      %s156 = sphi 0, %s142
      %s160 = sphi 0, %s160
      %s162 = sphi 0, %s160
      %s163 = sphi 0, %s162
      %s177 = sphi 0, %s163
      %s183 = sphi 0, %s185
      %s186 = sphi 0, %s183
      %s187 = sphi 0, %s186
      %s203 = sphi 0, %s187
    $region4: #{tpu_custom_call.1} parent=1 // loop_header_branch
      %24 = sbr.rel (%p22) target = $region8
    $region5: #{tpu_custom_call.1} parent=1 // loop_body
      %s26 = ssub.s32 %s21, 1
      %s27 = ssub.s32 %s21, 2
      %s28 = sadd.s32 %s21, 1
      %s29 = ssub.s32 %s21, %s28
      %p30 = scmp.eq.s32.totalorder %s29, 0
      %s32 = sadd.s32 %s31, 1
      %s33 = scalar_select %p30, %s31, %s32
      %p36 = pneg %p30
      %p37 = scmp.eq.s32.totalorder %s21, 1
      %p38 = por %p36, %p37
      %p39 = scmp.ne.s32.totalorder %s31, %s34
      %p40 = scmp.eq.s32.totalorder %s21, 0
      %p41 = por %p39, %p40
      %p42 = scmp.ne.s32.totalorder %s31, %s34
      %p43 = scmp.eq.s32.totalorder %s26, 1
      %p44 = por %p42, %p43
      %p45 = scmp.ne.s32.totalorder %s34, %s35
      %p46 = scmp.eq.s32.totalorder %s26, 0
      %p47 = por %p45, %p46
      %p48 = scmp.ne.s32.totalorder %s34, %s35
      %p49 = scmp.eq.s32.totalorder %s27, 1
      %p50 = por %p48, %p49
      %p52 = scmp.ne.s32.totalorder %s35, %s51
      %p53 = scmp.eq.s32.totalorder %s27, 0
      %p54 = por %p52, %p53
      %s56 = sadd.s32 %s55, 1
      %p59 = scmp.eq.s32.totalorder %s21, 1
      %p60 = scmp.ne.s32.totalorder %s55, %s57
      %p61 = scmp.eq.s32.totalorder %s21, 0
      %p62 = por %p60, %p61
      %p63 = scmp.ne.s32.totalorder %s55, %s57
      %p64 = scmp.eq.s32.totalorder %s26, 1
      %p65 = por %p63, %p64
      %p66 = scmp.ne.s32.totalorder %s57, %s58
      %p67 = scmp.eq.s32.totalorder %s26, 0
      %p68 = por %p66, %p67
      %p69 = scmp.ne.s32.totalorder %s57, %s58
      %p70 = scmp.eq.s32.totalorder %s27, 1
      %p71 = por %p69, %p70
      %p73 = scmp.ne.s32.totalorder %s58, %s72
      %p74 = scmp.eq.s32.totalorder %s27, 0
      %p75 = por %p73, %p74
      %s77 = sadd.s32 %s76, 1
      %p80 = scmp.eq.s32.totalorder %s21, 1
      %p81 = scmp.ne.s32.totalorder %s76, %s78
      %p82 = scmp.eq.s32.totalorder %s21, 0
      %p83 = por %p81, %p82
      %p84 = scmp.ne.s32.totalorder %s76, %s78
      %p85 = scmp.eq.s32.totalorder %s26, 1
      %p86 = por %p84, %p85
      %p87 = scmp.ne.s32.totalorder %s78, %s79
      %p88 = scmp.eq.s32.totalorder %s26, 0
      %p89 = por %p87, %p88
      %p90 = scmp.ne.s32.totalorder %s78, %s79
      %p91 = scmp.eq.s32.totalorder %s27, 1
      %p92 = por %p90, %p91
      %p94 = scmp.ne.s32.totalorder %s79, %s93
      %p95 = scmp.eq.s32.totalorder %s27, 0
      %p96 = por %p94, %p95
      %s98 = sadd.s32 %s97, 1
      %p101 = scmp.eq.s32.totalorder %s21, 1
      %p102 = scmp.ne.s32.totalorder %s97, %s99
      %p103 = scmp.eq.s32.totalorder %s21, 0
      %p104 = por %p102, %p103
      %p105 = scmp.ne.s32.totalorder %s97, %s99
      %p106 = scmp.eq.s32.totalorder %s26, 1
      %p107 = por %p105, %p106
      %p108 = scmp.ne.s32.totalorder %s99, %s100
      %p109 = scmp.eq.s32.totalorder %s26, 0
      %p110 = por %p108, %p109
      %p111 = scmp.ne.s32.totalorder %s99, %s100
      %p112 = scmp.eq.s32.totalorder %s27, 1
      %p113 = por %p111, %p112
      %p115 = scmp.ne.s32.totalorder %s100, %s114
      %p116 = scmp.eq.s32.totalorder %s27, 0
      %p117 = por %p115, %p116
      %s119 = sadd.s32 %s118, 1
      %p122 = scmp.eq.s32.totalorder %s21, 1
      %p123 = scmp.ne.s32.totalorder %s118, %s120
      %p124 = scmp.eq.s32.totalorder %s21, 0
      %p125 = por %p123, %p124
      %p126 = scmp.ne.s32.totalorder %s118, %s120
      %p127 = scmp.eq.s32.totalorder %s26, 1
      %p128 = por %p126, %p127
      %p129 = scmp.ne.s32.totalorder %s120, %s121
      %p130 = scmp.eq.s32.totalorder %s26, 0
      %p131 = por %p129, %p130
      %p132 = scmp.ne.s32.totalorder %s120, %s121
      %p133 = scmp.eq.s32.totalorder %s27, 1
      %p134 = por %p132, %p133
      %p136 = scmp.ne.s32.totalorder %s121, %s135
      %p137 = scmp.eq.s32.totalorder %s27, 0
      %p138 = por %p136, %p137
      %s140 = sadd.s32 %s139, 1
      %p143 = scmp.eq.s32.totalorder %s21, 1
      %p144 = scmp.ne.s32.totalorder %s139, %s141
      %p145 = scmp.eq.s32.totalorder %s21, 0
      %p146 = por %p144, %p145
      %p147 = scmp.ne.s32.totalorder %s139, %s141
      %p148 = scmp.eq.s32.totalorder %s26, 1
      %p149 = por %p147, %p148
      %p150 = scmp.ne.s32.totalorder %s141, %s142
      %p151 = scmp.eq.s32.totalorder %s26, 0
      %p152 = por %p150, %p151
      %p153 = scmp.ne.s32.totalorder %s141, %s142
      %p154 = scmp.eq.s32.totalorder %s27, 1
      %p155 = por %p153, %p154
      %p157 = scmp.ne.s32.totalorder %s142, %s156
      %p158 = scmp.eq.s32.totalorder %s27, 0
      %p159 = por %p157, %p158
      %s161 = sadd.s32 %s160, 1
      %p164 = scmp.eq.s32.totalorder %s21, 1
      %p165 = scmp.ne.s32.totalorder %s160, %s162
      %p166 = scmp.eq.s32.totalorder %s21, 0
      %p167 = por %p165, %p166
      %p168 = scmp.ne.s32.totalorder %s160, %s162
      %p169 = scmp.eq.s32.totalorder %s26, 1
      %p170 = por %p168, %p169
      %p171 = scmp.ne.s32.totalorder %s162, %s163
      %p172 = scmp.eq.s32.totalorder %s26, 0
      %p173 = por %p171, %p172
      %p174 = scmp.ne.s32.totalorder %s162, %s163
      %p175 = scmp.eq.s32.totalorder %s27, 1
      %p176 = por %p174, %p175
      %p178 = scmp.ne.s32.totalorder %s163, %s177
      %p179 = scmp.eq.s32.totalorder %s27, 0
      %p180 = por %p178, %p179
      %s181 = ssub.s32 %s21, %s28
      %p182 = scmp.eq.s32.totalorder %s181, 0
      %s184 = sadd.s32 %s183, 1
      %s185 = scalar_select %p182, %s183, %s184
      %p188 = pneg %p182
      %p189 = scmp.eq.s32.totalorder %s21, 1
      %p190 = por %p188, %p189
      %p191 = scmp.ne.s32.totalorder %s183, %s186
      %p192 = scmp.eq.s32.totalorder %s21, 0
      %p193 = por %p191, %p192
      %p194 = scmp.ne.s32.totalorder %s183, %s186
      %p195 = scmp.eq.s32.totalorder %s26, 1
      %p196 = por %p194, %p195
      %p197 = scmp.ne.s32.totalorder %s186, %s187
      %p198 = scmp.eq.s32.totalorder %s26, 0
      %p199 = por %p197, %p198
      %p200 = scmp.ne.s32.totalorder %s186, %s187
      %p201 = scmp.eq.s32.totalorder %s27, 1
      %p202 = por %p200, %p201
      %p204 = scmp.ne.s32.totalorder %s187, %s203
      %p205 = scmp.eq.s32.totalorder %s27, 0
      %p206 = por %p204, %p205
      %p207 = scmp.le.s32.totalorder 1, %s21
      %p208 = scmp.lt.s32.totalorder %s21, 3
      %p209 = pnand %p207, %p208
      %p210 = pneg %p209
      // Predicated region
      $region9: #{tpu_custom_call.1} parent=5 // pred_check
        _
      $region10: #{tpu_custom_call.1} parent=5 // pred_check_branch
        %212 = sbr.rel (%p209) target = $region12
      $region11: #{tpu_custom_call.1} parent=5 // pred_region
        %s213 = ssub.s32 %s21, 1
        // Predicated region
        $region13: #{tpu_custom_call.1} parent=11 // pred_check
          %p214 = pneg %p68
        $region14: #{tpu_custom_call.1} parent=11 // pred_check_branch
          %216 = sbr.rel (%p214) target = $region16
        $region15: #{tpu_custom_call.1} parent=11 // pred_region
          %218 = vsyncadd [#allocation6], 0
          %s219 = sshll.u32 %s1, 4
          %s220 = int_to_ptr.hbm [resolvable:$true] %s219
          %s221 = sshll.u32 [#allocation5], 4
          %s222 = int_to_ptr.vmem [resolvable:$true] %s221
          %227 = dma.hbm_to_vmem [thread:$0]  %s220, 2048, %s222, [#allocation6], 128, 128, 8
        $region16: #{tpu_custom_call.1} parent=11 // pred_fallthru
          _
        // Predicated region
        $region17: #{tpu_custom_call.1} parent=11 // pred_check
          %p228 = pneg %p89
        $region18: #{tpu_custom_call.1} parent=11 // pred_check_branch
          %230 = sbr.rel (%p228) target = $region20
        $region19: #{tpu_custom_call.1} parent=11 // pred_region
          %232 = vsyncadd [#allocation6], 0
          %s234 = sshll.u32 %s2, 4
          %s235 = int_to_ptr.hbm [resolvable:$true] %s234
          %s236 = sshll.u32 [#allocation7], 4
          %s237 = int_to_ptr.vmem [resolvable:$true] %s236
          %239 = dma.hbm_to_vmem [thread:$0]  %s235, 32, %s237, [#allocation6]
        $region20: #{tpu_custom_call.1} parent=11 // pred_fallthru
          _
        // Predicated region
        $region21: #{tpu_custom_call.1} parent=11 // pred_check
          %p240 = pneg %p110
        $region22: #{tpu_custom_call.1} parent=11 // pred_check_branch
          %242 = sbr.rel (%p240) target = $region24
        $region23: #{tpu_custom_call.1} parent=11 // pred_region
          %244 = vsyncadd [#allocation9], 0
          %s245 = sshll.u32 %s3, 4
          %s246 = int_to_ptr.hbm [resolvable:$true] %s245
          %s247 = sshll.u32 [#allocation8], 4
          %s248 = int_to_ptr.vmem [resolvable:$true] %s247
          %253 = dma.hbm_to_vmem [thread:$0]  %s246, 2048, %s248, [#allocation9], 64, 64, 4
        $region24: #{tpu_custom_call.1} parent=11 // pred_fallthru
          _
        // Predicated region
        $region25: #{tpu_custom_call.1} parent=11 // pred_check
          %p254 = pneg %p131
        $region26: #{tpu_custom_call.1} parent=11 // pred_check_branch
          %256 = sbr.rel (%p254) target = $region28
        $region27: #{tpu_custom_call.1} parent=11 // pred_region
          _
        $region28: #{tpu_custom_call.1} parent=11 // pred_fallthru
          _
        // Predicated region
        $region29: #{tpu_custom_call.1} parent=11 // pred_check
          %p257 = pneg %p152
        $region30: #{tpu_custom_call.1} parent=11 // pred_check_branch
          %259 = sbr.rel (%p257) target = $region32
        $region31: #{tpu_custom_call.1} parent=11 // pred_region
          %261 = vsyncadd [#allocation9], 0
          %s262 = sshll.u32 %s5, 4
          %s263 = int_to_ptr.hbm [resolvable:$true] %s262
          %s264 = sshll.u32 [#allocation10], 4
          %s265 = int_to_ptr.vmem [resolvable:$true] %s264
          %270 = dma.hbm_to_vmem [thread:$0]  %s263, 1024, %s265, [#allocation9], 64, 64, 4
        $region32: #{tpu_custom_call.1} parent=11 // pred_fallthru
          _
        // Predicated region
        $region33: #{tpu_custom_call.1} parent=11 // pred_check
          %p271 = pneg %p173
        $region34: #{tpu_custom_call.1} parent=11 // pred_check_branch
          %273 = sbr.rel (%p271) target = $region36
        $region35: #{tpu_custom_call.1} parent=11 // pred_region
          _
        $region36: #{tpu_custom_call.1} parent=11 // pred_fallthru
          _
      $region12: #{tpu_custom_call.1} parent=5 // pred_fallthru
        _
      %p274 = scmp.lt.s32.totalorder %s21, 2
      // Predicated region
      $region37: #{tpu_custom_call.1} parent=5 // pred_check
        %p275 = pneg %p274
      $region38: #{tpu_custom_call.1} parent=5 // pred_check_branch
        %277 = sbr.rel (%p275) target = $region40
      $region39: #{tpu_custom_call.1} parent=5 // pred_region
        // Predicated region
        $region41: #{tpu_custom_call.1} parent=39 // pred_check
          %p278 = pneg %p41
        $region42: #{tpu_custom_call.1} parent=39 // pred_check_branch
          %280 = sbr.rel (%p278) target = $region44
        $region43: #{tpu_custom_call.1} parent=39 // pred_region
          %s281 = sand.u32 %s31, 1
          %s282 = scalar_lea.sflag [#allocation3], %s281
          %s283 = sand.u32 %s31, 1
          %s284 = smul.addr %s283, 128
          %s285 = scalar_lea.vmem [#allocation2], %s284
          %s286 = smul.u32 32, %s21
          %288 = vsyncadd %s282, 0
          %s289 = smul.addr %s286, 4
          %s290 = scalar_lea.hbm %s0, %s289
          %s291 = sshll.u32 %s290, 4
          %s292 = int_to_ptr.hbm [resolvable:$true] %s291
          %s293 = sshll.u32 %s285, 4
          %s294 = int_to_ptr.vmem [resolvable:$true] %s293
          %299 = dma.hbm_to_vmem [thread:$0]  %s292, 2048, %s294, %s282, 64, 64, 4
        $region44: #{tpu_custom_call.1} parent=39 // pred_fallthru
          _
      $region40: #{tpu_custom_call.1} parent=5 // pred_fallthru
        _
      %p300 = scmp.le.s32.totalorder 1, %s21
      %p301 = scmp.lt.s32.totalorder %s21, 3
      %p302 = pnand %p300, %p301
      %p303 = pneg %p302
      // Predicated region
      $region45: #{tpu_custom_call.1} parent=5 // pred_check
        _
      $region46: #{tpu_custom_call.1} parent=5 // pred_check_branch
        %305 = sbr.rel (%p302) target = $region48
      $region47: #{tpu_custom_call.1} parent=5 // pred_region
        %s306 = ssub.s32 %s21, 1
        %s307 = sand.u32 %s34, 1
        %s308 = scalar_lea.sflag [#allocation3], %s307
        %s309 = sand.u32 %s34, 1
        %s310 = smul.addr %s309, 128
        %s311 = scalar_lea.vmem [#allocation2], %s310
        // Predicated region
        $region49: #{tpu_custom_call.1} parent=47 // pred_check
          %p312 = pneg %p47
        $region50: #{tpu_custom_call.1} parent=47 // pred_check_branch
          %314 = sbr.rel (%p312) target = $region52
        $region51: #{tpu_custom_call.1} parent=47 // pred_region
          %316 = dma.done %s308, 2048
        $region52: #{tpu_custom_call.1} parent=47 // pred_fallthru
          _
        // Predicated region
        $region53: #{tpu_custom_call.1} parent=47 // pred_check
          %p317 = pneg %p68
        $region54: #{tpu_custom_call.1} parent=47 // pred_check_branch
          %319 = sbr.rel (%p317) target = $region56
        $region55: #{tpu_custom_call.1} parent=47 // pred_region
          %321 = dma.done [#allocation6], 2048
        $region56: #{tpu_custom_call.1} parent=47 // pred_fallthru
          _
        // Predicated region
        $region57: #{tpu_custom_call.1} parent=47 // pred_check
          %p322 = pneg %p89
        $region58: #{tpu_custom_call.1} parent=47 // pred_check_branch
          %324 = sbr.rel (%p322) target = $region60
        $region59: #{tpu_custom_call.1} parent=47 // pred_region
          %326 = dma.done [#allocation6], 32
        $region60: #{tpu_custom_call.1} parent=47 // pred_fallthru
          _
        // Predicated region
        $region61: #{tpu_custom_call.1} parent=47 // pred_check
          %p327 = pneg %p110
        $region62: #{tpu_custom_call.1} parent=47 // pred_check_branch
          %329 = sbr.rel (%p327) target = $region64
        $region63: #{tpu_custom_call.1} parent=47 // pred_region
          %331 = dma.done [#allocation9], 2048
        $region64: #{tpu_custom_call.1} parent=47 // pred_fallthru
          _
        // Predicated region
        $region65: #{tpu_custom_call.1} parent=47 // pred_check
          %p332 = pneg %p152
        $region66: #{tpu_custom_call.1} parent=47 // pred_check_branch
          %334 = sbr.rel (%p332) target = $region68
        $region67: #{tpu_custom_call.1} parent=47 // pred_region
          %336 = dma.done [#allocation9], 1024
        $region68: #{tpu_custom_call.1} parent=47 // pred_fallthru
          _
        %s337 = sand.u32 %s34, 1
        %s338 = scalar_lea.sflag [#allocation3], %s337
        %s339 = sand.u32 %s34, 1
        %s340 = smul.addr %s339, 128
        %s341 = scalar_lea.vmem [#allocation2], %s340
        %p342 = pneg %p47
        %p343 = pneg %p44
        %p344 = pneg %p68
        %p345 = pneg %p65
        %p346 = pneg %p89
        %p347 = pneg %p86
        %p348 = pneg %p110
        %p349 = pneg %p107
        %p350 = pneg %p131
        %p351 = pneg %p128
        %p352 = pneg %p152
        %p353 = pneg %p149
        %p354 = pneg %p173
        %p355 = pneg %p170
        %p356 = pneg %p199
        %p357 = pneg %p196
        %s358 = sand.u32 %s186, 1
        %s359 = scalar_lea.sflag [#allocation4], %s358
        %s360 = sand.u32 %s186, 1
        %s361 = smul.addr %s360, 256
        %s362 = scalar_lea.vmem [#allocation11], %s361
        %s363 = smul.u32 32, %s26
        %s364 = smul.u32 32, %s26
        %v365 = vld [vmem:[%s311] sm:$0xf]
        %v366 = vld [vmem:[%s311 + $0x4] sm:$0xf]
        %v367 = vld [vmem:[%s311 + $0x8] sm:$0xf]
        %v368 = vld [vmem:[%s311 + $0xc] sm:$0xf]
        %v369 = vld [vmem:[%s311 + $0x10] sm:$0xf]
        %v370 = vld [vmem:[%s311 + $0x14] sm:$0xf]
        %v371 = vld [vmem:[%s311 + $0x18] sm:$0xf]
        %v372 = vld [vmem:[%s311 + $0x1c] sm:$0xf]
        %v373 = vld [vmem:[%s311 + $0x20] sm:$0xf]
        %v374 = vld [vmem:[%s311 + $0x24] sm:$0xf]
        %v375 = vld [vmem:[%s311 + $0x28] sm:$0xf]
        %v376 = vld [vmem:[%s311 + $0x2c] sm:$0xf]
        %v377 = vld [vmem:[%s311 + $0x30] sm:$0xf]
        %v378 = vld [vmem:[%s311 + $0x34] sm:$0xf]
        %v379 = vld [vmem:[%s311 + $0x38] sm:$0xf]
        %v380 = vld [vmem:[%s311 + $0x3c] sm:$0xf]
        %v381 = vld [vmem:[%s311 + $0x40] sm:$0xf]
        %v382 = vld [vmem:[%s311 + $0x44] sm:$0xf]
        %v383 = vld [vmem:[%s311 + $0x48] sm:$0xf]
        %v384 = vld [vmem:[%s311 + $0x4c] sm:$0xf]
        %v385 = vld [vmem:[%s311 + $0x50] sm:$0xf]
        %v386 = vld [vmem:[%s311 + $0x54] sm:$0xf]
        %v387 = vld [vmem:[%s311 + $0x58] sm:$0xf]
        %v388 = vld [vmem:[%s311 + $0x5c] sm:$0xf]
        %v389 = vld [vmem:[%s311 + $0x60] sm:$0xf]
        %v390 = vld [vmem:[%s311 + $0x64] sm:$0xf]
        %v391 = vld [vmem:[%s311 + $0x68] sm:$0xf]
        %v392 = vld [vmem:[%s311 + $0x6c] sm:$0xf]
        %v393 = vld [vmem:[%s311 + $0x70] sm:$0xf]
        %v394 = vld [vmem:[%s311 + $0x74] sm:$0xf]
        %v395 = vld [vmem:[%s311 + $0x78] sm:$0xf]
        %v396 = vld [vmem:[%s311 + $0x7c] sm:$0xf]
        %v397 = vld [vmem:[#allocation5] sm:$0xff]
        %v398 = vld [vmem:[#allocation5 + $0x8] sm:$0xff]
        %v399 = vld [vmem:[#allocation5 + $0x10] sm:$0xff]
        %v400 = vld [vmem:[#allocation5 + $0x18] sm:$0xff]
        %v401 = vld [vmem:[#allocation5 + $0x20] sm:$0xff]
        %v402 = vld [vmem:[#allocation5 + $0x28] sm:$0xff]
        %v403 = vld [vmem:[#allocation5 + $0x30] sm:$0xff]
        %v404 = vld [vmem:[#allocation5 + $0x38] sm:$0xff]
        %v405 = vld [vmem:[#allocation5 + $0x40] sm:$0xff]
        %v406 = vld [vmem:[#allocation5 + $0x48] sm:$0xff]
        %v407 = vld [vmem:[#allocation5 + $0x50] sm:$0xff]
        %v408 = vld [vmem:[#allocation5 + $0x58] sm:$0xff]
        %v409 = vld [vmem:[#allocation5 + $0x60] sm:$0xff]
        %v410 = vld [vmem:[#allocation5 + $0x68] sm:$0xff]
        %v411 = vld [vmem:[#allocation5 + $0x70] sm:$0xff]
        %v412 = vld [vmem:[#allocation5 + $0x78] sm:$0xff]
        %v413 = vld [vmem:[#allocation7] sm:$0x3]
        %v415 = vperm.slane %v413, 0
        %v416 = vperm.slane %v413, 1
        %v451 = vunpack.c.l.b16 %v365
        %v452 = vunpack.c.l.b16 %v366
        %v453 = vunpack.c.l.b16 %v367
        %v454 = vunpack.c.l.b16 %v368
        %v455 = vunpack.c.l.b16 %v369
        %v456 = vunpack.c.l.b16 %v370
        %v457 = vunpack.c.l.b16 %v371
        %v458 = vunpack.c.l.b16 %v372
        %v459 = vunpack.c.l.b16 %v373
        %v460 = vunpack.c.l.b16 %v374
        %v461 = vunpack.c.l.b16 %v375
        %v462 = vunpack.c.l.b16 %v376
        %v463 = vunpack.c.l.b16 %v377
        %v464 = vunpack.c.l.b16 %v378
        %v465 = vunpack.c.l.b16 %v379
        %v466 = vunpack.c.l.b16 %v380
        %v467 = vunpack.c.l.b16 %v381
        %v468 = vunpack.c.l.b16 %v382
        %v469 = vunpack.c.l.b16 %v383
        %v470 = vunpack.c.l.b16 %v384
        %v471 = vunpack.c.l.b16 %v385
        %v472 = vunpack.c.l.b16 %v386
        %v473 = vunpack.c.l.b16 %v387
        %v474 = vunpack.c.l.b16 %v388
        %v475 = vunpack.c.l.b16 %v389
        %v476 = vunpack.c.l.b16 %v390
        %v477 = vunpack.c.l.b16 %v391
        %v478 = vunpack.c.l.b16 %v392
        %v479 = vunpack.c.l.b16 %v393
        %v480 = vunpack.c.l.b16 %v394
        %v481 = vunpack.c.l.b16 %v395
        %v482 = vunpack.c.l.b16 %v396
        %v483 = vpack.c.b16 %v452, %v451
        %v484 = vpack.c.b16 %v454, %v453
        %v485 = vpack.c.b16 %v456, %v455
        %v486 = vpack.c.b16 %v458, %v457
        %v487 = vpack.c.b16 %v460, %v459
        %v488 = vpack.c.b16 %v462, %v461
        %v489 = vpack.c.b16 %v464, %v463
        %v490 = vpack.c.b16 %v466, %v465
        %v491 = vpack.c.b16 %v468, %v467
        %v492 = vpack.c.b16 %v470, %v469
        %v493 = vpack.c.b16 %v472, %v471
        %v494 = vpack.c.b16 %v474, %v473
        %v495 = vpack.c.b16 %v476, %v475
        %v496 = vpack.c.b16 %v478, %v477
        %v497 = vpack.c.b16 %v480, %v479
        %v498 = vpack.c.b16 %v482, %v481
        %v531 = vunpack.c.l.b16 %v397
        %v532 = vunpack.c.h.b16 %v397
        %v533 = vunpack.c.l.b16 %v398
        %v534 = vunpack.c.h.b16 %v398
        %v535 = vunpack.c.l.b16 %v399
        %v536 = vunpack.c.h.b16 %v399
        %v537 = vunpack.c.l.b16 %v400
        %v538 = vunpack.c.h.b16 %v400
        %v539 = vunpack.c.l.b16 %v401
        %v540 = vunpack.c.h.b16 %v401
        %v541 = vunpack.c.l.b16 %v402
        %v542 = vunpack.c.h.b16 %v402
        %v543 = vunpack.c.l.b16 %v403
        %v544 = vunpack.c.h.b16 %v403
        %v545 = vunpack.c.l.b16 %v404
        %v546 = vunpack.c.h.b16 %v404
        %v547 = vunpack.c.l.b16 %v405
        %v548 = vunpack.c.h.b16 %v405
        %v549 = vunpack.c.l.b16 %v406
        %v550 = vunpack.c.h.b16 %v406
        %v551 = vunpack.c.l.b16 %v407
        %v552 = vunpack.c.h.b16 %v407
        %v553 = vunpack.c.l.b16 %v408
        %v554 = vunpack.c.h.b16 %v408
        %v555 = vunpack.c.l.b16 %v409
        %v556 = vunpack.c.h.b16 %v409
        %v557 = vunpack.c.l.b16 %v410
        %v558 = vunpack.c.h.b16 %v410
        %v559 = vunpack.c.l.b16 %v411
        %v560 = vunpack.c.h.b16 %v411
        %v561 = vunpack.c.l.b16 %v412
        %v562 = vunpack.c.h.b16 %v412
        %v563 = vpack.c.b16 %v533, %v531
        %v564 = vpack.c.b16 %v534, %v532
        %v565 = vpack.c.b16 %v537, %v535
        %v566 = vpack.c.b16 %v538, %v536
        %v567 = vpack.c.b16 %v541, %v539
        %v568 = vpack.c.b16 %v542, %v540
        %v569 = vpack.c.b16 %v545, %v543
        %v570 = vpack.c.b16 %v546, %v544
        %v571 = vpack.c.b16 %v549, %v547
        %v572 = vpack.c.b16 %v550, %v548
        %v573 = vpack.c.b16 %v553, %v551
        %v574 = vpack.c.b16 %v554, %v552
        %v575 = vpack.c.b16 %v557, %v555
        %v576 = vpack.c.b16 %v558, %v556
        %v577 = vpack.c.b16 %v561, %v559
        %v578 = vpack.c.b16 %v562, %v560
        %595 = vmatpush.bf16.msra.mxu0 %v577
        %596 = vmatpush.bf16.msra.mxu0 %v575
        %597 = vmatpush.bf16.msra.mxu0 %v573
        %598 = vmatpush.bf16.msra.mxu0 %v571
        %599 = vmatpush.bf16.msra.mxu0 %v569
        %600 = vmatpush.bf16.msra.mxu0 %v567
        %601 = vmatpush.bf16.msra.mxu0 %v565
        %602 = vmatpush.bf16.msra.mxu0 %v563
        %603 = vmatmul.bf16.gmra.mxu0 %v483
        %v604 = vpop.f32.mrf.mxu0
        %v605 = vadd.f32 %v415, %v604
        %v606 = vpop.f32.mrf.mxu0
        %v607 = vadd.f32 %v415, %v606
        %608 = vmatmul.bf16.gmra.mxu0 %v484
        %v609 = vpop.f32.mrf.mxu0
        %v610 = vadd.f32 %v415, %v609
        %v611 = vpop.f32.mrf.mxu0
        %v612 = vadd.f32 %v415, %v611
        %613 = vmatmul.bf16.gmra.mxu0 %v485
        %v614 = vpop.f32.mrf.mxu0
        %v615 = vadd.f32 %v415, %v614
        %v616 = vpop.f32.mrf.mxu0
        %v617 = vadd.f32 %v415, %v616
        %618 = vmatmul.bf16.gmra.mxu0 %v486
        %v619 = vpop.f32.mrf.mxu0
        %v620 = vadd.f32 %v415, %v619
        %v621 = vpop.f32.mrf.mxu0
        %v622 = vadd.f32 %v415, %v621
        %623 = vmatmul.bf16.gmra.mxu0 %v487
        %v624 = vpop.f32.mrf.mxu0
        %v625 = vadd.f32 %v415, %v624
        %v626 = vpop.f32.mrf.mxu0
        %v627 = vadd.f32 %v415, %v626
        %628 = vmatmul.bf16.gmra.mxu0 %v488
        %v629 = vpop.f32.mrf.mxu0
        %v630 = vadd.f32 %v415, %v629
        %v631 = vpop.f32.mrf.mxu0
        %v632 = vadd.f32 %v415, %v631
        %633 = vmatmul.bf16.gmra.mxu0 %v489
        %v634 = vpop.f32.mrf.mxu0
        %v635 = vadd.f32 %v415, %v634
        %v636 = vpop.f32.mrf.mxu0
        %v637 = vadd.f32 %v415, %v636
        %638 = vmatmul.bf16.gmra.mxu0 %v490
        %v639 = vpop.f32.mrf.mxu0
        %v640 = vadd.f32 %v415, %v639
        %v641 = vpop.f32.mrf.mxu0
        %v642 = vadd.f32 %v415, %v641
        %643 = vmatmul.bf16.gmra.mxu0 %v491
        %v644 = vpop.f32.mrf.mxu0
        %v645 = vadd.f32 %v415, %v644
        %v646 = vpop.f32.mrf.mxu0
        %v647 = vadd.f32 %v415, %v646
        %648 = vmatmul.bf16.gmra.mxu0 %v492
        %v649 = vpop.f32.mrf.mxu0
        %v650 = vadd.f32 %v415, %v649
        %v651 = vpop.f32.mrf.mxu0
        %v652 = vadd.f32 %v415, %v651
        %653 = vmatmul.bf16.gmra.mxu0 %v493
        %v654 = vpop.f32.mrf.mxu0
        %v655 = vadd.f32 %v415, %v654
        %v656 = vpop.f32.mrf.mxu0
        %v657 = vadd.f32 %v415, %v656
        %658 = vmatmul.bf16.gmra.mxu0 %v494
        %v659 = vpop.f32.mrf.mxu0
        %v660 = vadd.f32 %v415, %v659
        %v661 = vpop.f32.mrf.mxu0
        %v662 = vadd.f32 %v415, %v661
        %663 = vmatmul.bf16.gmra.mxu0 %v495
        %v664 = vpop.f32.mrf.mxu0
        %v665 = vadd.f32 %v415, %v664
        %v666 = vpop.f32.mrf.mxu0
        %v667 = vadd.f32 %v415, %v666
        %668 = vmatmul.bf16.gmra.mxu0 %v496
        %v669 = vpop.f32.mrf.mxu0
        %v670 = vadd.f32 %v415, %v669
        %v671 = vpop.f32.mrf.mxu0
        %v672 = vadd.f32 %v415, %v671
        %673 = vmatmul.bf16.gmra.mxu0 %v497
        %v674 = vpop.f32.mrf.mxu0
        %v675 = vadd.f32 %v415, %v674
        %v676 = vpop.f32.mrf.mxu0
        %v677 = vadd.f32 %v415, %v676
        %678 = vmatmul.bf16.gmra.mxu0 %v498
        %v679 = vpop.f32.mrf.mxu0
        %v680 = vadd.f32 %v415, %v679
        %v681 = vpop.f32.mrf.mxu0
        %v682 = vadd.f32 %v415, %v681
        %683 = vdwg.mxu0
        %684 = vmatpush.bf16.msra.mxu0 %v578
        %685 = vmatpush.bf16.msra.mxu0 %v576
        %686 = vmatpush.bf16.msra.mxu0 %v574
        %687 = vmatpush.bf16.msra.mxu0 %v572
        %688 = vmatpush.bf16.msra.mxu0 %v570
        %689 = vmatpush.bf16.msra.mxu0 %v568
        %690 = vmatpush.bf16.msra.mxu0 %v566
        %691 = vmatpush.bf16.msra.mxu0 %v564
        %692 = vmatmul.bf16.gmra.mxu0 %v483
        %v693 = vpop.f32.mrf.mxu0
        %v694 = vadd.f32 %v416, %v693
        %v695 = vpop.f32.mrf.mxu0
        %v696 = vadd.f32 %v416, %v695
        %697 = vmatmul.bf16.gmra.mxu0 %v484
        %v698 = vpop.f32.mrf.mxu0
        %v699 = vadd.f32 %v416, %v698
        %v700 = vpop.f32.mrf.mxu0
        %v701 = vadd.f32 %v416, %v700
        %702 = vmatmul.bf16.gmra.mxu0 %v485
        %v703 = vpop.f32.mrf.mxu0
        %v704 = vadd.f32 %v416, %v703
        %v705 = vpop.f32.mrf.mxu0
        %v706 = vadd.f32 %v416, %v705
        %707 = vmatmul.bf16.gmra.mxu0 %v486
        %v708 = vpop.f32.mrf.mxu0
        %v709 = vadd.f32 %v416, %v708
        %v710 = vpop.f32.mrf.mxu0
        %v711 = vadd.f32 %v416, %v710
        %712 = vmatmul.bf16.gmra.mxu0 %v487
        %v713 = vpop.f32.mrf.mxu0
        %v714 = vadd.f32 %v416, %v713
        %v715 = vpop.f32.mrf.mxu0
        %v716 = vadd.f32 %v416, %v715
        %717 = vmatmul.bf16.gmra.mxu0 %v488
        %v718 = vpop.f32.mrf.mxu0
        %v719 = vadd.f32 %v416, %v718
        %v720 = vpop.f32.mrf.mxu0
        %v721 = vadd.f32 %v416, %v720
        %722 = vmatmul.bf16.gmra.mxu0 %v489
        %v723 = vpop.f32.mrf.mxu0
        %v724 = vadd.f32 %v416, %v723
        %v725 = vpop.f32.mrf.mxu0
        %v726 = vadd.f32 %v416, %v725
        %727 = vmatmul.bf16.gmra.mxu0 %v490
        %v728 = vpop.f32.mrf.mxu0
        %v729 = vadd.f32 %v416, %v728
        %v730 = vpop.f32.mrf.mxu0
        %v731 = vadd.f32 %v416, %v730
        %732 = vmatmul.bf16.gmra.mxu0 %v491
        %v733 = vpop.f32.mrf.mxu0
        %v734 = vadd.f32 %v416, %v733
        %v735 = vpop.f32.mrf.mxu0
        %v736 = vadd.f32 %v416, %v735
        %737 = vmatmul.bf16.gmra.mxu0 %v492
        %v738 = vpop.f32.mrf.mxu0
        %v739 = vadd.f32 %v416, %v738
        %v740 = vpop.f32.mrf.mxu0
        %v741 = vadd.f32 %v416, %v740
        %742 = vmatmul.bf16.gmra.mxu0 %v493
        %v743 = vpop.f32.mrf.mxu0
        %v744 = vadd.f32 %v416, %v743
        %v745 = vpop.f32.mrf.mxu0
        %v746 = vadd.f32 %v416, %v745
        %747 = vmatmul.bf16.gmra.mxu0 %v494
        %v748 = vpop.f32.mrf.mxu0
        %v749 = vadd.f32 %v416, %v748
        %v750 = vpop.f32.mrf.mxu0
        %v751 = vadd.f32 %v416, %v750
        %752 = vmatmul.bf16.gmra.mxu0 %v495
        %v753 = vpop.f32.mrf.mxu0
        %v754 = vadd.f32 %v416, %v753
        %v755 = vpop.f32.mrf.mxu0
        %v756 = vadd.f32 %v416, %v755
        %757 = vmatmul.bf16.gmra.mxu0 %v496
        %v758 = vpop.f32.mrf.mxu0
        %v759 = vadd.f32 %v416, %v758
        %v760 = vpop.f32.mrf.mxu0
        %v761 = vadd.f32 %v416, %v760
        %762 = vmatmul.bf16.gmra.mxu0 %v497
        %v763 = vpop.f32.mrf.mxu0
        %v764 = vadd.f32 %v416, %v763
        %v765 = vpop.f32.mrf.mxu0
        %v766 = vadd.f32 %v416, %v765
        %767 = vmatmul.bf16.gmra.mxu0 %v498
        %v768 = vpop.f32.mrf.mxu0
        %v769 = vadd.f32 %v416, %v768
        %v770 = vpop.f32.mrf.mxu0
        %v771 = vadd.f32 %v416, %v770
        %772 = vdwg.mxu0
        %v773 = vmax.f32 %v605, 0.0
        %v774 = vmax.f32 %v694, 0.0
        %v775 = vmax.f32 %v607, 0.0
        %v776 = vmax.f32 %v696, 0.0
        %v777 = vmax.f32 %v610, 0.0
        %v778 = vmax.f32 %v699, 0.0
        %v779 = vmax.f32 %v612, 0.0
        %v780 = vmax.f32 %v701, 0.0
        %v781 = vmax.f32 %v615, 0.0
        %v782 = vmax.f32 %v704, 0.0
        %v783 = vmax.f32 %v617, 0.0
        %v784 = vmax.f32 %v706, 0.0
        %v785 = vmax.f32 %v620, 0.0
        %v786 = vmax.f32 %v709, 0.0
        %v787 = vmax.f32 %v622, 0.0
        %v788 = vmax.f32 %v711, 0.0
        %v789 = vmax.f32 %v625, 0.0
        %v790 = vmax.f32 %v714, 0.0
        %v791 = vmax.f32 %v627, 0.0
        %v792 = vmax.f32 %v716, 0.0
        %v793 = vmax.f32 %v630, 0.0
        %v794 = vmax.f32 %v719, 0.0
        %v795 = vmax.f32 %v632, 0.0
        %v796 = vmax.f32 %v721, 0.0
        %v797 = vmax.f32 %v635, 0.0
        %v798 = vmax.f32 %v724, 0.0
        %v799 = vmax.f32 %v637, 0.0
        %v800 = vmax.f32 %v726, 0.0
        %v801 = vmax.f32 %v640, 0.0
        %v802 = vmax.f32 %v729, 0.0
        %v803 = vmax.f32 %v642, 0.0
        %v804 = vmax.f32 %v731, 0.0
        %v805 = vmax.f32 %v645, 0.0
        %v806 = vmax.f32 %v734, 0.0
        %v807 = vmax.f32 %v647, 0.0
        %v808 = vmax.f32 %v736, 0.0
        %v809 = vmax.f32 %v650, 0.0
        %v810 = vmax.f32 %v739, 0.0
        %v811 = vmax.f32 %v652, 0.0
        %v812 = vmax.f32 %v741, 0.0
        %v813 = vmax.f32 %v655, 0.0
        %v814 = vmax.f32 %v744, 0.0
        %v815 = vmax.f32 %v657, 0.0
        %v816 = vmax.f32 %v746, 0.0
        %v817 = vmax.f32 %v660, 0.0
        %v818 = vmax.f32 %v749, 0.0
        %v819 = vmax.f32 %v662, 0.0
        %v820 = vmax.f32 %v751, 0.0
        %v821 = vmax.f32 %v665, 0.0
        %v822 = vmax.f32 %v754, 0.0
        %v823 = vmax.f32 %v667, 0.0
        %v824 = vmax.f32 %v756, 0.0
        %v825 = vmax.f32 %v670, 0.0
        %v826 = vmax.f32 %v759, 0.0
        %v827 = vmax.f32 %v672, 0.0
        %v828 = vmax.f32 %v761, 0.0
        %v829 = vmax.f32 %v675, 0.0
        %v830 = vmax.f32 %v764, 0.0
        %v831 = vmax.f32 %v677, 0.0
        %v832 = vmax.f32 %v766, 0.0
        %v833 = vmax.f32 %v680, 0.0
        %v834 = vmax.f32 %v769, 0.0
        %v835 = vmax.f32 %v682, 0.0
        %v836 = vmax.f32 %v771, 0.0
        %v837 = vpack.c.bf16 %v775, %v773
        %v838 = vpack.c.bf16 %v776, %v774
        %v839 = vpack.c.bf16 %v779, %v777
        %v840 = vpack.c.bf16 %v780, %v778
        %v841 = vpack.c.bf16 %v783, %v781
        %v842 = vpack.c.bf16 %v784, %v782
        %v843 = vpack.c.bf16 %v787, %v785
        %v844 = vpack.c.bf16 %v788, %v786
        %v845 = vpack.c.bf16 %v791, %v789
        %v846 = vpack.c.bf16 %v792, %v790
        %v847 = vpack.c.bf16 %v795, %v793
        %v848 = vpack.c.bf16 %v796, %v794
        %v849 = vpack.c.bf16 %v799, %v797
        %v850 = vpack.c.bf16 %v800, %v798
        %v851 = vpack.c.bf16 %v803, %v801
        %v852 = vpack.c.bf16 %v804, %v802
        %v853 = vpack.c.bf16 %v807, %v805
        %v854 = vpack.c.bf16 %v808, %v806
        %v855 = vpack.c.bf16 %v811, %v809
        %v856 = vpack.c.bf16 %v812, %v810
        %v857 = vpack.c.bf16 %v815, %v813
        %v858 = vpack.c.bf16 %v816, %v814
        %v859 = vpack.c.bf16 %v819, %v817
        %v860 = vpack.c.bf16 %v820, %v818
        %v861 = vpack.c.bf16 %v823, %v821
        %v862 = vpack.c.bf16 %v824, %v822
        %v863 = vpack.c.bf16 %v827, %v825
        %v864 = vpack.c.bf16 %v828, %v826
        %v865 = vpack.c.bf16 %v831, %v829
        %v866 = vpack.c.bf16 %v832, %v830
        %v867 = vpack.c.bf16 %v835, %v833
        %v868 = vpack.c.bf16 %v836, %v834
        %v869 = vld [vmem:[#allocation8] sm:$0xf]
        %v870 = vld [vmem:[#allocation8 + $0x4] sm:$0xf]
        %v871 = vld [vmem:[#allocation8 + $0x8] sm:$0xf]
        %v872 = vld [vmem:[#allocation8 + $0xc] sm:$0xf]
        %v873 = vld [vmem:[#allocation8 + $0x10] sm:$0xf]
        %v874 = vld [vmem:[#allocation8 + $0x14] sm:$0xf]
        %v875 = vld [vmem:[#allocation8 + $0x18] sm:$0xf]
        %v876 = vld [vmem:[#allocation8 + $0x1c] sm:$0xf]
        %v877 = vld [vmem:[#allocation8 + $0x20] sm:$0xf]
        %v878 = vld [vmem:[#allocation8 + $0x24] sm:$0xf]
        %v879 = vld [vmem:[#allocation8 + $0x28] sm:$0xf]
        %v880 = vld [vmem:[#allocation8 + $0x2c] sm:$0xf]
        %v881 = vld [vmem:[#allocation8 + $0x30] sm:$0xf]
        %v882 = vld [vmem:[#allocation8 + $0x34] sm:$0xf]
        %v883 = vld [vmem:[#allocation8 + $0x38] sm:$0xf]
        %v884 = vld [vmem:[#allocation8 + $0x3c] sm:$0xf]
        %v885 = vld [vmem:[#allocation8 + $0x40] sm:$0xf]
        %v886 = vld [vmem:[#allocation8 + $0x44] sm:$0xf]
        %v887 = vld [vmem:[#allocation8 + $0x48] sm:$0xf]
        %v888 = vld [vmem:[#allocation8 + $0x4c] sm:$0xf]
        %v889 = vld [vmem:[#allocation8 + $0x50] sm:$0xf]
        %v890 = vld [vmem:[#allocation8 + $0x54] sm:$0xf]
        %v891 = vld [vmem:[#allocation8 + $0x58] sm:$0xf]
        %v892 = vld [vmem:[#allocation8 + $0x5c] sm:$0xf]
        %v893 = vld [vmem:[#allocation8 + $0x60] sm:$0xf]
        %v894 = vld [vmem:[#allocation8 + $0x64] sm:$0xf]
        %v895 = vld [vmem:[#allocation8 + $0x68] sm:$0xf]
        %v896 = vld [vmem:[#allocation8 + $0x6c] sm:$0xf]
        %v897 = vld [vmem:[#allocation8 + $0x70] sm:$0xf]
        %v898 = vld [vmem:[#allocation8 + $0x74] sm:$0xf]
        %v899 = vld [vmem:[#allocation8 + $0x78] sm:$0xf]
        %v900 = vld [vmem:[#allocation8 + $0x7c] sm:$0xf]
        %v901 = vld [vmem:[%s4] sm:$0x1]
        %v903 = vperm.slane %v901, 0
        %v937 = vunpack.c.l.b16 %v869
        %v938 = vunpack.c.l.b16 %v870
        %v939 = vunpack.c.l.b16 %v871
        %v940 = vunpack.c.l.b16 %v872
        %v941 = vunpack.c.l.b16 %v873
        %v942 = vunpack.c.l.b16 %v874
        %v943 = vunpack.c.l.b16 %v875
        %v944 = vunpack.c.l.b16 %v876
        %v945 = vunpack.c.l.b16 %v877
        %v946 = vunpack.c.l.b16 %v878
        %v947 = vunpack.c.l.b16 %v879
        %v948 = vunpack.c.l.b16 %v880
        %v949 = vunpack.c.l.b16 %v881
        %v950 = vunpack.c.l.b16 %v882
        %v951 = vunpack.c.l.b16 %v883
        %v952 = vunpack.c.l.b16 %v884
        %v953 = vunpack.c.l.b16 %v885
        %v954 = vunpack.c.l.b16 %v886
        %v955 = vunpack.c.l.b16 %v887
        %v956 = vunpack.c.l.b16 %v888
        %v957 = vunpack.c.l.b16 %v889
        %v958 = vunpack.c.l.b16 %v890
        %v959 = vunpack.c.l.b16 %v891
        %v960 = vunpack.c.l.b16 %v892
        %v961 = vunpack.c.l.b16 %v893
        %v962 = vunpack.c.l.b16 %v894
        %v963 = vunpack.c.l.b16 %v895
        %v964 = vunpack.c.l.b16 %v896
        %v965 = vunpack.c.l.b16 %v897
        %v966 = vunpack.c.l.b16 %v898
        %v967 = vunpack.c.l.b16 %v899
        %v968 = vunpack.c.l.b16 %v900
        %v969 = vpack.c.b16 %v938, %v937
        %v970 = vpack.c.b16 %v940, %v939
        %v971 = vpack.c.b16 %v942, %v941
        %v972 = vpack.c.b16 %v944, %v943
        %v973 = vpack.c.b16 %v946, %v945
        %v974 = vpack.c.b16 %v948, %v947
        %v975 = vpack.c.b16 %v950, %v949
        %v976 = vpack.c.b16 %v952, %v951
        %v977 = vpack.c.b16 %v954, %v953
        %v978 = vpack.c.b16 %v956, %v955
        %v979 = vpack.c.b16 %v958, %v957
        %v980 = vpack.c.b16 %v960, %v959
        %v981 = vpack.c.b16 %v962, %v961
        %v982 = vpack.c.b16 %v964, %v963
        %v983 = vpack.c.b16 %v966, %v965
        %v984 = vpack.c.b16 %v968, %v967
        %1001 = vmatpush.bf16.msra.mxu0 %v976
        %1002 = vmatpush.bf16.msra.mxu0 %v975
        %1003 = vmatpush.bf16.msra.mxu0 %v974
        %1004 = vmatpush.bf16.msra.mxu0 %v973
        %1005 = vmatpush.bf16.msra.mxu0 %v972
        %1006 = vmatpush.bf16.msra.mxu0 %v971
        %1007 = vmatpush.bf16.msra.mxu0 %v970
        %1008 = vmatpush.bf16.msra.mxu0 %v969
        %1009 = vmatmul.bf16.gmra.mxu0 %v837
        %v1010 = vpop.f32.mrf.mxu0
        %v1011 = vadd.f32 %v903, %v1010
        %v1012 = vpop.f32.mrf.mxu0
        %v1013 = vadd.f32 %v903, %v1012
        %1014 = vmatmul.bf16.gmra.mxu0 %v839
        %v1015 = vpop.f32.mrf.mxu0
        %v1016 = vadd.f32 %v903, %v1015
        %v1017 = vpop.f32.mrf.mxu0
        %v1018 = vadd.f32 %v903, %v1017
        %1019 = vmatmul.bf16.gmra.mxu0 %v841
        %v1020 = vpop.f32.mrf.mxu0
        %v1021 = vadd.f32 %v903, %v1020
        %v1022 = vpop.f32.mrf.mxu0
        %v1023 = vadd.f32 %v903, %v1022
        %1024 = vmatmul.bf16.gmra.mxu0 %v843
        %v1025 = vpop.f32.mrf.mxu0
        %v1026 = vadd.f32 %v903, %v1025
        %v1027 = vpop.f32.mrf.mxu0
        %v1028 = vadd.f32 %v903, %v1027
        %1029 = vmatmul.bf16.gmra.mxu0 %v845
        %v1030 = vpop.f32.mrf.mxu0
        %v1031 = vadd.f32 %v903, %v1030
        %v1032 = vpop.f32.mrf.mxu0
        %v1033 = vadd.f32 %v903, %v1032
        %1034 = vmatmul.bf16.gmra.mxu0 %v847
        %v1035 = vpop.f32.mrf.mxu0
        %v1036 = vadd.f32 %v903, %v1035
        %v1037 = vpop.f32.mrf.mxu0
        %v1038 = vadd.f32 %v903, %v1037
        %1039 = vmatmul.bf16.gmra.mxu0 %v849
        %v1040 = vpop.f32.mrf.mxu0
        %v1041 = vadd.f32 %v903, %v1040
        %v1042 = vpop.f32.mrf.mxu0
        %v1043 = vadd.f32 %v903, %v1042
        %1044 = vmatmul.bf16.gmra.mxu0 %v851
        %v1045 = vpop.f32.mrf.mxu0
        %v1046 = vadd.f32 %v903, %v1045
        %v1047 = vpop.f32.mrf.mxu0
        %v1048 = vadd.f32 %v903, %v1047
        %1049 = vmatmul.bf16.gmra.mxu0 %v853
        %v1050 = vpop.f32.mrf.mxu0
        %v1051 = vadd.f32 %v903, %v1050
        %v1052 = vpop.f32.mrf.mxu0
        %v1053 = vadd.f32 %v903, %v1052
        %1054 = vmatmul.bf16.gmra.mxu0 %v855
        %v1055 = vpop.f32.mrf.mxu0
        %v1056 = vadd.f32 %v903, %v1055
        %v1057 = vpop.f32.mrf.mxu0
        %v1058 = vadd.f32 %v903, %v1057
        %1059 = vmatmul.bf16.gmra.mxu0 %v857
        %v1060 = vpop.f32.mrf.mxu0
        %v1061 = vadd.f32 %v903, %v1060
        %v1062 = vpop.f32.mrf.mxu0
        %v1063 = vadd.f32 %v903, %v1062
        %1064 = vmatmul.bf16.gmra.mxu0 %v859
        %v1065 = vpop.f32.mrf.mxu0
        %v1066 = vadd.f32 %v903, %v1065
        %v1067 = vpop.f32.mrf.mxu0
        %v1068 = vadd.f32 %v903, %v1067
        %1069 = vmatmul.bf16.gmra.mxu0 %v861
        %v1070 = vpop.f32.mrf.mxu0
        %v1071 = vadd.f32 %v903, %v1070
        %v1072 = vpop.f32.mrf.mxu0
        %v1073 = vadd.f32 %v903, %v1072
        %1074 = vmatmul.bf16.gmra.mxu0 %v863
        %v1075 = vpop.f32.mrf.mxu0
        %v1076 = vadd.f32 %v903, %v1075
        %v1077 = vpop.f32.mrf.mxu0
        %v1078 = vadd.f32 %v903, %v1077
        %1079 = vmatmul.bf16.gmra.mxu0 %v865
        %v1080 = vpop.f32.mrf.mxu0
        %v1081 = vadd.f32 %v903, %v1080
        %v1082 = vpop.f32.mrf.mxu0
        %v1083 = vadd.f32 %v903, %v1082
        %1084 = vmatmul.bf16.gmra.mxu0 %v867
        %v1085 = vpop.f32.mrf.mxu0
        %v1086 = vadd.f32 %v903, %v1085
        %v1087 = vpop.f32.mrf.mxu0
        %v1088 = vadd.f32 %v903, %v1087
        %1089 = vdwg.mxu0
        %1090 = vmatpush.bf16.msra.mxu0 %v984
        %1091 = vmatpush.bf16.msra.mxu0 %v983
        %1092 = vmatpush.bf16.msra.mxu0 %v982
        %1093 = vmatpush.bf16.msra.mxu0 %v981
        %1094 = vmatpush.bf16.msra.mxu0 %v980
        %1095 = vmatpush.bf16.msra.mxu0 %v979
        %1096 = vmatpush.bf16.msra.mxu0 %v978
        %1097 = vmatpush.bf16.msra.mxu0 %v977
        %1098 = vmatmul.bf16.gmra.mxu0 %v838
        %v1099 = vpop.f32.mrf.mxu0
        %v1100 = vadd.f32 %v1011, %v1099
        %v1101 = vpop.f32.mrf.mxu0
        %v1102 = vadd.f32 %v1013, %v1101
        %1103 = vmatmul.bf16.gmra.mxu0 %v840
        %v1104 = vpop.f32.mrf.mxu0
        %v1105 = vadd.f32 %v1016, %v1104
        %v1106 = vpop.f32.mrf.mxu0
        %v1107 = vadd.f32 %v1018, %v1106
        %1108 = vmatmul.bf16.gmra.mxu0 %v842
        %v1109 = vpop.f32.mrf.mxu0
        %v1110 = vadd.f32 %v1021, %v1109
        %v1111 = vpop.f32.mrf.mxu0
        %v1112 = vadd.f32 %v1023, %v1111
        %1113 = vmatmul.bf16.gmra.mxu0 %v844
        %v1114 = vpop.f32.mrf.mxu0
        %v1115 = vadd.f32 %v1026, %v1114
        %v1116 = vpop.f32.mrf.mxu0
        %v1117 = vadd.f32 %v1028, %v1116
        %1118 = vmatmul.bf16.gmra.mxu0 %v846
        %v1119 = vpop.f32.mrf.mxu0
        %v1120 = vadd.f32 %v1031, %v1119
        %v1121 = vpop.f32.mrf.mxu0
        %v1122 = vadd.f32 %v1033, %v1121
        %1123 = vmatmul.bf16.gmra.mxu0 %v848
        %v1124 = vpop.f32.mrf.mxu0
        %v1125 = vadd.f32 %v1036, %v1124
        %v1126 = vpop.f32.mrf.mxu0
        %v1127 = vadd.f32 %v1038, %v1126
        %1128 = vmatmul.bf16.gmra.mxu0 %v850
        %v1129 = vpop.f32.mrf.mxu0
        %v1130 = vadd.f32 %v1041, %v1129
        %v1131 = vpop.f32.mrf.mxu0
        %v1132 = vadd.f32 %v1043, %v1131
        %1133 = vmatmul.bf16.gmra.mxu0 %v852
        %v1134 = vpop.f32.mrf.mxu0
        %v1135 = vadd.f32 %v1046, %v1134
        %v1136 = vpop.f32.mrf.mxu0
        %v1137 = vadd.f32 %v1048, %v1136
        %1138 = vmatmul.bf16.gmra.mxu0 %v854
        %v1139 = vpop.f32.mrf.mxu0
        %v1140 = vadd.f32 %v1051, %v1139
        %v1141 = vpop.f32.mrf.mxu0
        %v1142 = vadd.f32 %v1053, %v1141
        %1143 = vmatmul.bf16.gmra.mxu0 %v856
        %v1144 = vpop.f32.mrf.mxu0
        %v1145 = vadd.f32 %v1056, %v1144
        %v1146 = vpop.f32.mrf.mxu0
        %v1147 = vadd.f32 %v1058, %v1146
        %1148 = vmatmul.bf16.gmra.mxu0 %v858
        %v1149 = vpop.f32.mrf.mxu0
        %v1150 = vadd.f32 %v1061, %v1149
        %v1151 = vpop.f32.mrf.mxu0
        %v1152 = vadd.f32 %v1063, %v1151
        %1153 = vmatmul.bf16.gmra.mxu0 %v860
        %v1154 = vpop.f32.mrf.mxu0
        %v1155 = vadd.f32 %v1066, %v1154
        %v1156 = vpop.f32.mrf.mxu0
        %v1157 = vadd.f32 %v1068, %v1156
        %1158 = vmatmul.bf16.gmra.mxu0 %v862
        %v1159 = vpop.f32.mrf.mxu0
        %v1160 = vadd.f32 %v1071, %v1159
        %v1161 = vpop.f32.mrf.mxu0
        %v1162 = vadd.f32 %v1073, %v1161
        %1163 = vmatmul.bf16.gmra.mxu0 %v864
        %v1164 = vpop.f32.mrf.mxu0
        %v1165 = vadd.f32 %v1076, %v1164
        %v1166 = vpop.f32.mrf.mxu0
        %v1167 = vadd.f32 %v1078, %v1166
        %1168 = vmatmul.bf16.gmra.mxu0 %v866
        %v1169 = vpop.f32.mrf.mxu0
        %v1170 = vadd.f32 %v1081, %v1169
        %v1171 = vpop.f32.mrf.mxu0
        %v1172 = vadd.f32 %v1083, %v1171
        %1173 = vmatmul.bf16.gmra.mxu0 %v868
        %v1174 = vpop.f32.mrf.mxu0
        %v1175 = vadd.f32 %v1086, %v1174
        %v1176 = vpop.f32.mrf.mxu0
        %v1177 = vadd.f32 %v1088, %v1176
        %1178 = vdwg.mxu0
        %v1179 = vmax.f32 %v1100, 0.0
        %v1180 = vmax.f32 %v1102, 0.0
        %v1181 = vmax.f32 %v1105, 0.0
        %v1182 = vmax.f32 %v1107, 0.0
        %v1183 = vmax.f32 %v1110, 0.0
        %v1184 = vmax.f32 %v1112, 0.0
        %v1185 = vmax.f32 %v1115, 0.0
        %v1186 = vmax.f32 %v1117, 0.0
        %v1187 = vmax.f32 %v1120, 0.0
        %v1188 = vmax.f32 %v1122, 0.0
        %v1189 = vmax.f32 %v1125, 0.0
        %v1190 = vmax.f32 %v1127, 0.0
        %v1191 = vmax.f32 %v1130, 0.0
        %v1192 = vmax.f32 %v1132, 0.0
        %v1193 = vmax.f32 %v1135, 0.0
        %v1194 = vmax.f32 %v1137, 0.0
        %v1195 = vmax.f32 %v1140, 0.0
        %v1196 = vmax.f32 %v1142, 0.0
        %v1197 = vmax.f32 %v1145, 0.0
        %v1198 = vmax.f32 %v1147, 0.0
        %v1199 = vmax.f32 %v1150, 0.0
        %v1200 = vmax.f32 %v1152, 0.0
        %v1201 = vmax.f32 %v1155, 0.0
        %v1202 = vmax.f32 %v1157, 0.0
        %v1203 = vmax.f32 %v1160, 0.0
        %v1204 = vmax.f32 %v1162, 0.0
        %v1205 = vmax.f32 %v1165, 0.0
        %v1206 = vmax.f32 %v1167, 0.0
        %v1207 = vmax.f32 %v1170, 0.0
        %v1208 = vmax.f32 %v1172, 0.0
        %v1209 = vmax.f32 %v1175, 0.0
        %v1210 = vmax.f32 %v1177, 0.0
        %v1211 = vpack.c.bf16 %v1180, %v1179
        %v1212 = vpack.c.bf16 %v1182, %v1181
        %v1213 = vpack.c.bf16 %v1184, %v1183
        %v1214 = vpack.c.bf16 %v1186, %v1185
        %v1215 = vpack.c.bf16 %v1188, %v1187
        %v1216 = vpack.c.bf16 %v1190, %v1189
        %v1217 = vpack.c.bf16 %v1192, %v1191
        %v1218 = vpack.c.bf16 %v1194, %v1193
        %v1219 = vpack.c.bf16 %v1196, %v1195
        %v1220 = vpack.c.bf16 %v1198, %v1197
        %v1221 = vpack.c.bf16 %v1200, %v1199
        %v1222 = vpack.c.bf16 %v1202, %v1201
        %v1223 = vpack.c.bf16 %v1204, %v1203
        %v1224 = vpack.c.bf16 %v1206, %v1205
        %v1225 = vpack.c.bf16 %v1208, %v1207
        %v1226 = vpack.c.bf16 %v1210, %v1209
        %v1227 = vld [vmem:[#allocation10] sm:$0xf]
        %v1228 = vld [vmem:[#allocation10 + $0x4] sm:$0xf]
        %v1229 = vld [vmem:[#allocation10 + $0x8] sm:$0xf]
        %v1230 = vld [vmem:[#allocation10 + $0xc] sm:$0xf]
        %v1231 = vld [vmem:[#allocation10 + $0x10] sm:$0xf]
        %v1232 = vld [vmem:[#allocation10 + $0x14] sm:$0xf]
        %v1233 = vld [vmem:[#allocation10 + $0x18] sm:$0xf]
        %v1234 = vld [vmem:[#allocation10 + $0x1c] sm:$0xf]
        %v1235 = vld [vmem:[#allocation10 + $0x20] sm:$0xf]
        %v1236 = vld [vmem:[#allocation10 + $0x24] sm:$0xf]
        %v1237 = vld [vmem:[#allocation10 + $0x28] sm:$0xf]
        %v1238 = vld [vmem:[#allocation10 + $0x2c] sm:$0xf]
        %v1239 = vld [vmem:[#allocation10 + $0x30] sm:$0xf]
        %v1240 = vld [vmem:[#allocation10 + $0x34] sm:$0xf]
        %v1241 = vld [vmem:[#allocation10 + $0x38] sm:$0xf]
        %v1242 = vld [vmem:[#allocation10 + $0x3c] sm:$0xf]
        %v1243 = vld [vmem:[%s6] sm:$0x1]
        %v1245 = vperm.slane %v1243, 0
        %v1263 = vunpack.c.l.b16 %v1227
        %v1264 = vunpack.c.l.b16 %v1228
        %v1265 = vunpack.c.l.b16 %v1229
        %v1266 = vunpack.c.l.b16 %v1230
        %v1267 = vunpack.c.l.b16 %v1231
        %v1268 = vunpack.c.l.b16 %v1232
        %v1269 = vunpack.c.l.b16 %v1233
        %v1270 = vunpack.c.l.b16 %v1234
        %v1271 = vunpack.c.l.b16 %v1235
        %v1272 = vunpack.c.l.b16 %v1236
        %v1273 = vunpack.c.l.b16 %v1237
        %v1274 = vunpack.c.l.b16 %v1238
        %v1275 = vunpack.c.l.b16 %v1239
        %v1276 = vunpack.c.l.b16 %v1240
        %v1277 = vunpack.c.l.b16 %v1241
        %v1278 = vunpack.c.l.b16 %v1242
        %v1279 = vpack.c.b16 %v1264, %v1263
        %v1280 = vpack.c.b16 %v1266, %v1265
        %v1281 = vpack.c.b16 %v1268, %v1267
        %v1282 = vpack.c.b16 %v1270, %v1269
        %v1283 = vpack.c.b16 %v1272, %v1271
        %v1284 = vpack.c.b16 %v1274, %v1273
        %v1285 = vpack.c.b16 %v1276, %v1275
        %v1286 = vpack.c.b16 %v1278, %v1277
        %1295 = vmatpush.bf16.msra.mxu0 %v1286
        %1296 = vmatpush.bf16.msra.mxu0 %v1285
        %1297 = vmatpush.bf16.msra.mxu0 %v1284
        %1298 = vmatpush.bf16.msra.mxu0 %v1283
        %1299 = vmatpush.bf16.msra.mxu0 %v1282
        %1300 = vmatpush.bf16.msra.mxu0 %v1281
        %1301 = vmatpush.bf16.msra.mxu0 %v1280
        %1302 = vmatpush.bf16.msra.mxu0 %v1279
        %1303 = vmatmul.bf16.gmra.mxu0 %v1211
        %v1304 = vpop.f32.mrf.mxu0
        %v1305 = vadd.f32 %v1245, %v1304
        %v1306 = vpop.f32.mrf.mxu0
        %v1307 = vadd.f32 %v1245, %v1306
        %1308 = vmatmul.bf16.gmra.mxu0 %v1212
        %v1309 = vpop.f32.mrf.mxu0
        %v1310 = vadd.f32 %v1245, %v1309
        %v1311 = vpop.f32.mrf.mxu0
        %v1312 = vadd.f32 %v1245, %v1311
        %1313 = vmatmul.bf16.gmra.mxu0 %v1213
        %v1314 = vpop.f32.mrf.mxu0
        %v1315 = vadd.f32 %v1245, %v1314
        %v1316 = vpop.f32.mrf.mxu0
        %v1317 = vadd.f32 %v1245, %v1316
        %1318 = vmatmul.bf16.gmra.mxu0 %v1214
        %v1319 = vpop.f32.mrf.mxu0
        %v1320 = vadd.f32 %v1245, %v1319
        %v1321 = vpop.f32.mrf.mxu0
        %v1322 = vadd.f32 %v1245, %v1321
        %1323 = vmatmul.bf16.gmra.mxu0 %v1215
        %v1324 = vpop.f32.mrf.mxu0
        %v1325 = vadd.f32 %v1245, %v1324
        %v1326 = vpop.f32.mrf.mxu0
        %v1327 = vadd.f32 %v1245, %v1326
        %1328 = vmatmul.bf16.gmra.mxu0 %v1216
        %v1329 = vpop.f32.mrf.mxu0
        %v1330 = vadd.f32 %v1245, %v1329
        %v1331 = vpop.f32.mrf.mxu0
        %v1332 = vadd.f32 %v1245, %v1331
        %1333 = vmatmul.bf16.gmra.mxu0 %v1217
        %v1334 = vpop.f32.mrf.mxu0
        %v1335 = vadd.f32 %v1245, %v1334
        %v1336 = vpop.f32.mrf.mxu0
        %v1337 = vadd.f32 %v1245, %v1336
        %1338 = vmatmul.bf16.gmra.mxu0 %v1218
        %v1339 = vpop.f32.mrf.mxu0
        %v1340 = vadd.f32 %v1245, %v1339
        %v1341 = vpop.f32.mrf.mxu0
        %v1342 = vadd.f32 %v1245, %v1341
        %1343 = vmatmul.bf16.gmra.mxu0 %v1219
        %v1344 = vpop.f32.mrf.mxu0
        %v1345 = vadd.f32 %v1245, %v1344
        %v1346 = vpop.f32.mrf.mxu0
        %v1347 = vadd.f32 %v1245, %v1346
        %1348 = vmatmul.bf16.gmra.mxu0 %v1220
        %v1349 = vpop.f32.mrf.mxu0
        %v1350 = vadd.f32 %v1245, %v1349
        %v1351 = vpop.f32.mrf.mxu0
        %v1352 = vadd.f32 %v1245, %v1351
        %1353 = vmatmul.bf16.gmra.mxu0 %v1221
        %v1354 = vpop.f32.mrf.mxu0
        %v1355 = vadd.f32 %v1245, %v1354
        %v1356 = vpop.f32.mrf.mxu0
        %v1357 = vadd.f32 %v1245, %v1356
        %1358 = vmatmul.bf16.gmra.mxu0 %v1222
        %v1359 = vpop.f32.mrf.mxu0
        %v1360 = vadd.f32 %v1245, %v1359
        %v1361 = vpop.f32.mrf.mxu0
        %v1362 = vadd.f32 %v1245, %v1361
        %1363 = vmatmul.bf16.gmra.mxu0 %v1223
        %v1364 = vpop.f32.mrf.mxu0
        %v1365 = vadd.f32 %v1245, %v1364
        %v1366 = vpop.f32.mrf.mxu0
        %v1367 = vadd.f32 %v1245, %v1366
        %1368 = vmatmul.bf16.gmra.mxu0 %v1224
        %v1369 = vpop.f32.mrf.mxu0
        %v1370 = vadd.f32 %v1245, %v1369
        %v1371 = vpop.f32.mrf.mxu0
        %v1372 = vadd.f32 %v1245, %v1371
        %1373 = vmatmul.bf16.gmra.mxu0 %v1225
        %v1374 = vpop.f32.mrf.mxu0
        %v1375 = vadd.f32 %v1245, %v1374
        %v1376 = vpop.f32.mrf.mxu0
        %v1377 = vadd.f32 %v1245, %v1376
        %1378 = vmatmul.bf16.gmra.mxu0 %v1226
        %v1379 = vpop.f32.mrf.mxu0
        %v1380 = vadd.f32 %v1245, %v1379
        %v1381 = vpop.f32.mrf.mxu0
        %v1382 = vadd.f32 %v1245, %v1381
        %1383 = vdwg.mxu0
        %1384 = vst [vmem:[%s362] sm:$0xff] %v1305
        %1385 = vst [vmem:[%s362 + $0x8] sm:$0xff] %v1307
        %1386 = vst [vmem:[%s362 + $0x10] sm:$0xff] %v1310
        %1387 = vst [vmem:[%s362 + $0x18] sm:$0xff] %v1312
        %1388 = vst [vmem:[%s362 + $0x20] sm:$0xff] %v1315
        %1389 = vst [vmem:[%s362 + $0x28] sm:$0xff] %v1317
        %1390 = vst [vmem:[%s362 + $0x30] sm:$0xff] %v1320
        %1391 = vst [vmem:[%s362 + $0x38] sm:$0xff] %v1322
        %1392 = vst [vmem:[%s362 + $0x40] sm:$0xff] %v1325
        %1393 = vst [vmem:[%s362 + $0x48] sm:$0xff] %v1327
        %1394 = vst [vmem:[%s362 + $0x50] sm:$0xff] %v1330
        %1395 = vst [vmem:[%s362 + $0x58] sm:$0xff] %v1332
        %1396 = vst [vmem:[%s362 + $0x60] sm:$0xff] %v1335
        %1397 = vst [vmem:[%s362 + $0x68] sm:$0xff] %v1337
        %1398 = vst [vmem:[%s362 + $0x70] sm:$0xff] %v1340
        %1399 = vst [vmem:[%s362 + $0x78] sm:$0xff] %v1342
        %1400 = vst [vmem:[%s362 + $0x80] sm:$0xff] %v1345
        %1401 = vst [vmem:[%s362 + $0x88] sm:$0xff] %v1347
        %1402 = vst [vmem:[%s362 + $0x90] sm:$0xff] %v1350
        %1403 = vst [vmem:[%s362 + $0x98] sm:$0xff] %v1352
        %1404 = vst [vmem:[%s362 + $0xa0] sm:$0xff] %v1355
        %1405 = vst [vmem:[%s362 + $0xa8] sm:$0xff] %v1357
        %1406 = vst [vmem:[%s362 + $0xb0] sm:$0xff] %v1360
        %1407 = vst [vmem:[%s362 + $0xb8] sm:$0xff] %v1362
        %1408 = vst [vmem:[%s362 + $0xc0] sm:$0xff] %v1365
        %1409 = vst [vmem:[%s362 + $0xc8] sm:$0xff] %v1367
        %1410 = vst [vmem:[%s362 + $0xd0] sm:$0xff] %v1370
        %1411 = vst [vmem:[%s362 + $0xd8] sm:$0xff] %v1372
        %1412 = vst [vmem:[%s362 + $0xe0] sm:$0xff] %v1375
        %1413 = vst [vmem:[%s362 + $0xe8] sm:$0xff] %v1377
        %1414 = vst [vmem:[%s362 + $0xf0] sm:$0xff] %v1380
        %1415 = vst [vmem:[%s362 + $0xf8] sm:$0xff] %v1382
        %s1416 = sand.u32 %s186, 1
        %s1417 = scalar_lea.sflag [#allocation4], %s1416
        %s1418 = sand.u32 %s186, 1
        %s1419 = smul.addr %s1418, 256
        %s1420 = scalar_lea.vmem [#allocation11], %s1419
        // Predicated region
        $region69: #{tpu_custom_call.1} parent=47 // pred_check
          %p1421 = pneg %p196
        $region70: #{tpu_custom_call.1} parent=47 // pred_check_branch
          %1423 = sbr.rel (%p1421) target = $region72
        $region71: #{tpu_custom_call.1} parent=47 // pred_region
          %s1424 = smul.u32 32, %s26
          %1426 = vsyncadd %s1417, 0
          %s1427 = smul.addr %s1424, 8
          %s1428 = scalar_lea.hbm %s7, %s1427
          %s1429 = sshll.u32 %s1420, 4
          %s1430 = int_to_ptr.vmem [resolvable:$true] %s1429
          %s1431 = sshll.u32 %s1428, 4
          %s1432 = int_to_ptr.hbm [resolvable:$true] %s1431
          %1437 = dma.vmem_to_hbm [thread:$0]  %s1430, 4096, %s1432, %s1417, 128, 128, 8
        $region72: #{tpu_custom_call.1} parent=47 // pred_fallthru
          _
      $region48: #{tpu_custom_call.1} parent=5 // pred_fallthru
        _
      %p1438 = scmp.le.s32.totalorder 2, %s21
      // Predicated region
      $region73: #{tpu_custom_call.1} parent=5 // pred_check
        %p1439 = pneg %p1438
      $region74: #{tpu_custom_call.1} parent=5 // pred_check_branch
        %1441 = sbr.rel (%p1439) target = $region76
      $region75: #{tpu_custom_call.1} parent=5 // pred_region
        %s1442 = ssub.s32 %s21, 2
        // Predicated region
        $region77: #{tpu_custom_call.1} parent=75 // pred_check
          %p1443 = pneg %p202
        $region78: #{tpu_custom_call.1} parent=75 // pred_check_branch
          %1445 = sbr.rel (%p1443) target = $region80
        $region79: #{tpu_custom_call.1} parent=75 // pred_region
          %s1446 = sand.u32 %s187, 1
          %s1447 = scalar_lea.sflag [#allocation4], %s1446
          %s1448 = sand.u32 %s187, 1
          %s1449 = smul.addr %s1448, 256
          %s1450 = scalar_lea.vmem [#allocation11], %s1449
          %1452 = dma.done %s1447, 4096
        $region80: #{tpu_custom_call.1} parent=75 // pred_fallthru
          _
      $region76: #{tpu_custom_call.1} parent=5 // pred_fallthru
        _
    $region6: #{tpu_custom_call.1} parent=1 // loop_footer
      %s25 = sadd.s32 1, %s21
    $region7: #{tpu_custom_call.1} parent=1 // loop_footer_branch
      %20 = sbr.rel target = $region3
    $region8: #{tpu_custom_call.1} parent=1 // loop_exit
      _
    %1453 = vsyncpa [#allocation3], 1
    %s1454 = scalar_lea.sflag [#allocation3], 1
    %1455 = vsyncpa %s1454, 1
    %1456 = vsyncpa [#allocation6], 1
    %1457 = vsyncpa [#allocation9], 1
    %1458 = vsyncpa [#allocation4], 1
    %s1459 = scalar_lea.sflag [#allocation4], 1
    %1460 = vsyncpa %s1459, 1

</llo_original>
